<compile_context>
chip_gen: v5e
topology: v5e:2x2
jax: 0.10.0
libtpu: 0.0.40
codegen_flags: <defaults>
</compile_context>

<pallas_src>
import math
from functools import partial

import jax
import jax.numpy as jnp
from jax.experimental import pallas as pl
from jax.experimental.pallas import tpu as pltpu


def _round_up(a, b):
    return ((a + b - 1) // b) * b


def _lookahead_kernel(x_ref, halo_ref, w_ref, o_ref, seam_ref, *,
                      context, tile_t, halo_rows, strip_rows, seq_len,
                      grid_t, last_valid):
    # x_ref:    (tile_t, NH)        current time tile (input dtype)
    # halo_ref: (halo_rows, NH)     first rows of the *next* time tile
    # w_ref:    (context, NH)       depthwise taps broadcast over batch (f32)
    # o_ref:    (tile_t, NH)        output tile
    # seam_ref: (2*halo_rows, NH)   scratch for the seam rows (input dtype)
    i = pl.program_id(0)
    t0 = i * tile_t
    halo = context - 1
    n_bulk = tile_t - halo_rows
    n_strips = n_bulk // strip_rows

    # ---- Bulk rows [0, n_bulk): every tap c < context stays inside this tile.
    # Strip-mined: per-strip f32 accumulator lives in vregs, one store / strip.
    if n_strips > 0:
        def bulk_strip(s, carry):
            r0 = pl.multiple_of(s * strip_rows, strip_rows)
            acc = (x_ref[pl.ds(r0, strip_rows), :].astype(jnp.float32)
                   * w_ref[0:1, :])
            for c in range(1, context):   # context is small & static
                # TODO(synk): for very large context (>=~16) a single window
                # load per strip + pltpu.roll per tap would avoid the
                # sublane-misaligned per-tap loads.
                acc = acc + (x_ref[pl.ds(r0 + c, strip_rows), :]
                             .astype(jnp.float32) * w_ref[c:c + 1, :])
            o_ref[pl.ds(r0, strip_rows), :] = acc.astype(o_ref.dtype)
            return carry

        unroll = max(1, min(n_strips, 64 // max(1, context)))
        jax.lax.fori_loop(0, n_strips, bulk_strip, 0, unroll=unroll)

    # ---- Partial-last-tile fix-up (right zero-padding for bulk rows). -------
    # Bulk rows within `halo` of the sequence end read block-padding garbage;
    # recompute just those (<= halo) rows with the garbage masked to zero.
    # Static bounds; only emitted when the last tile is partial, only executed
    # on the last tile.
    fix_hi = min(last_valid, n_bulk)
    fix_lo = max(0, last_valid - halo)
    if fix_hi > fix_lo:
        fix_len = fix_hi - fix_lo
        win_len = fix_len + halo

        @pl.when(i == grid_t - 1)
        def _():
            win = x_ref[fix_lo:fix_lo + win_len, :].astype(jnp.float32)
            lids = jax.lax.broadcasted_iota(jnp.int32, (win_len, 1), 0) + fix_lo
            win = jnp.where(lids < last_valid, win, 0.0)
            acc = win[0:fix_len] * w_ref[0:1, :]
            for c in range(1, context):
                acc = acc + win[c:c + fix_len] * w_ref[c:c + 1, :]
            o_ref[fix_lo:fix_hi, :] = acc.astype(o_ref.dtype)

    # ---- Seam rows [n_bulk, tile_t): taps reach into the next tile. ---------
    seam_ref[0:halo_rows, :] = x_ref[n_bulk:tile_t, :]
    seam_ref[halo_rows:2 * halo_rows, :] = halo_ref[...]

    # Zero rows whose (intended) global time index is >= seq_len: this is the
    # virtual right zero-padding and also neutralizes clamped / padded halo
    # blocks.  Only tiles near the end of the sequence take this branch.
    @pl.when(t0 + tile_t + halo_rows > seq_len)
    def _():
        gids = (jax.lax.broadcasted_iota(jnp.int32, (2 * halo_rows, 1), 0)
                + (t0 + n_bulk))
        vals = seam_ref[...]
        seam_ref[...] = jnp.where(gids < seq_len, vals, jnp.zeros_like(vals))

    acc = seam_ref[0:halo_rows, :].astype(jnp.float32) * w_ref[0:1, :]
    for c in range(1, context):
        acc = acc + (seam_ref[c:c + halo_rows, :].astype(jnp.float32)
                     * w_ref[c:c + 1, :])
    o_ref[n_bulk:tile_t, :] = acc.astype(o_ref.dtype)


def lookahead(x, w, context, *, target_block_bytes=4 << 20):
    """DeepSpeech Lookahead forward.

    x: (T, N, H) activations (f32 or bf16)
    w: (context, H) depthwise filter (= torch conv weight (H,1,context) transposed)
    returns (T, N, H), same dtype as x.
    """
    assert context > 0
    T, N, H = x.shape
    assert w.shape == (context, H)
    NH = N * H
    itemsize = jnp.dtype(x.dtype).itemsize
    row_align = max(8, 32 // itemsize)            # packed sublane granularity
    halo = context - 1
    halo_rows = max(row_align, _round_up(halo, row_align))

    # ---- Lane layout: features+batch on the 128-lane axis. ------------------
    x2 = x.reshape(T, NH)
    w_flat = jnp.tile(w, (1, N)).astype(jnp.float32)   # (context, N*H), [c, n*H+h] = w[c, h]
    if NH < 128:
        NH_eff = 128
        x2 = jnp.pad(x2, ((0, 0), (0, NH_eff - NH)))
        w_flat = jnp.pad(w_flat, ((0, 0), (0, NH_eff - NH)))
    else:
        NH_eff = NH          # full-dim last block dim: no host pad / slice pass

    # ---- Strip size: keep the per-strip f32 accumulator in vregs. -----------
    acc_budget_elems = 8 * 1024            # ~8 f32 vregs for the accumulator
    max_strip = (acc_budget_elems // NH_eff) // row_align * row_align
    max_strip = max(row_align, min(max_strip, 256, _round_up(T, row_align)))
    if max_strip >= halo_rows:
        strip_rows = (max_strip // halo_rows) * halo_rows   # multiple of halo_rows
    else:
        strip_rows = row_align                               # divides halo_rows
    granule = max(strip_rows, halo_rows)   # tile_t = halo_rows + n * granule

    # ---- Tile size from a byte budget + per-generation VMEM capacity. -------
    try:
        vmem_cap = int(pltpu.get_tpu_info().vmem_capacity_bytes)
    except Exception:
        vmem_cap = 64 << 20                # conservative (v7x per-TC VMEM)
    vmem_budget = vmem_cap // 2            # headroom for halo/weights/scratch

    bytes_per_row = NH_eff * itemsize
    rows_vmem = max(halo_rows, vmem_budget // (4 * bytes_per_row))  # in+out, x2 dbuf
    rows_target = max(halo_rows, target_block_bytes // bytes_per_row)
    rows_desired = min(rows_target, rows_vmem, _round_up(T, row_align))
    # Keep >= 2 time tiles when the sequence is long enough (megacore on v7x).
    if T >= 2 * (halo_rows + granule):
        rows_desired = min(rows_desired, pl.cdiv(T, 2))

    n_gran = max(0, (rows_desired - halo_rows + granule // 2) // granule)
    tile_t = halo_rows + n_gran * granule

    grid_t = pl.cdiv(T, tile_t)
    n_halo_blocks = pl.cdiv(T, halo_rows)
    k_ratio = tile_t // halo_rows                 # tile_t is a multiple of halo_rows
    last_valid = T - (grid_t - 1) * tile_t        # valid rows in the last tile

    # Actual VMEM footprint -> vmem_limit_bytes (instead of a hard-coded value).
    x_blk = tile_t * bytes_per_row
    halo_blk = halo_rows * bytes_per_row
    w_blk = context * NH_eff * 4
    out_blk = tile_t * bytes_per_row
    seam_blk = 2 * halo_rows * bytes_per_row
    footprint = 2 * (x_blk + halo_blk + w_blk + out_blk) + seam_blk
    vmem_limit = int(min(int(vmem_cap * 0.9),
                         max(footprint + footprint // 4 + (2 << 20), 16 << 20)))

    def x_map(i):
        return (i, 0)

    def halo_map(i):
        # First halo_rows rows of the next tile; clamp so the block index stays
        # valid.  Clamped / padded rows are masked inside the kernel.
        return (jnp.minimum((i + 1) * k_ratio, n_halo_blocks - 1), 0)

    kernel = partial(_lookahead_kernel, context=context, tile_t=tile_t,
                     halo_rows=halo_rows, strip_rows=strip_rows, seq_len=T,
                     grid_t=grid_t, last_valid=last_valid)

    out2 = pl.pallas_call(
        kernel,
        out_shape=jax.ShapeDtypeStruct((T, NH_eff), x.dtype),
        grid_spec=pltpu.PrefetchScalarGridSpec(
            num_scalar_prefetch=0,
            grid=(grid_t,),
            in_specs=[
                pl.BlockSpec((tile_t, NH_eff), x_map),
                pl.BlockSpec((halo_rows, NH_eff), halo_map),
                pl.BlockSpec((context, NH_eff), lambda i: (0, 0)),  # resident taps
            ],
            out_specs=pl.BlockSpec((tile_t, NH_eff), x_map),
            scratch_shapes=[pltpu.VMEM((2 * halo_rows, NH_eff), x.dtype)],
        ),
        compiler_params=pltpu.CompilerParams(
            dimension_semantics=("parallel",),     # time tiles are independent
            vmem_limit_bytes=vmem_limit,
        ),
    )(x2, x2, w_flat)

    if NH_eff != NH:
        out2 = out2[:, :NH]
    return out2.reshape(T, N, H)


def _reference(x, w, context):
    T = x.shape[0]
    x_pad = jnp.pad(x.astype(jnp.float32), ((0, context - 1), (0, 0), (0, 0)))
    out = sum(x_pad[c:c + T] * w[c].astype(jnp.float32)[None, None, :]
              for c in range(context))
    return out.astype(x.dtype)


if __name__ == "__main__":
    key = jax.random.PRNGKey(0)
    k1, k2, k3, k4, k5, k6 = jax.random.split(key, 6)

    # Test 1: small shapes matching the module spec (seq=16, batch=4, n_features=32).
    T, N, H, context = 16, 4, 32, 3
    x = jax.random.normal(k1, (T, N, H), dtype=jnp.float32)
    bound = 1.0 / math.sqrt(context)   # mimic torch Conv1d default init (fan_in=context)
    w = jax.random.uniform(k2, (context, H), dtype=jnp.float32,
                           minval=-bound, maxval=bound)
    out = jax.block_until_ready(lookahead(x, w, context))
    ref = _reference(x, w, context)
    assert out.shape == (T, N, H)
    assert jnp.allclose(out, ref, atol=1e-5, rtol=1e-5)

    # Test 2: multi-tile time grid, partial last tile, cross-tile halo, and
    # N*H < 128 (lane padding path).
    T2, N2, H2, context2 = 200, 2, 48, 5
    x2 = jax.random.normal(k3, (T2, N2, H2), dtype=jnp.float32)
    bound2 = 1.0 / math.sqrt(context2)
    w2 = jax.random.uniform(k4, (context2, H2), dtype=jnp.float32,
                            minval=-bound2, maxval=bound2)
    out2 = jax.block_until_ready(lookahead(x2, w2, context2))
    ref2 = _reference(x2, w2, context2)
    assert out2.shape == (T2, N2, H2)
    assert jnp.allclose(out2, ref2, atol=1e-5, rtol=1e-5)

    # Test 3: N*H >= 128 but not a multiple of 128 (full-dim lane block, no host
    # pad/slice), larger context, partial bulk fix-up on a single tile.
    T3, N3, H3, context3 = 45, 2, 80, 7
    x3 = jax.random.normal(k5, (T3, N3, H3), dtype=jnp.float32)
    bound3 = 1.0 / math.sqrt(context3)
    w3 = jax.random.uniform(k6, (context3, H3), dtype=jnp.float32,
                            minval=-bound3, maxval=bound3)
    out3 = jax.block_until_ready(lookahead(x3, w3, context3))
    ref3 = _reference(x3, w3, context3)
    assert out3.shape == (T3, N3, H3)
    assert jnp.allclose(out3, ref3, atol=1e-5, rtol=1e-5)

    print("KERNEL_OK")
</pallas_src>

<mosaic_0001>
module attributes {stable_mosaic.version = 11 : i64} {
  func.func @_lookahead_kernel(%arg0: i32, %arg1: memref<24x128xf32, #tpu.memory_space<vmem>>, %arg2: memref<8x128xf32, #tpu.memory_space<vmem>>, %arg3: memref<3x128xf32, #tpu.memory_space<vmem>>, %arg4: memref<24x128xf32, #tpu.memory_space<vmem>>, %arg5: memref<16x128xf32, #tpu.memory_space<vmem>>) attributes {dimension_semantics = [#tpu.dimension_semantics<parallel>], iteration_bounds = array<i64: 1>, scalar_prefetch = 0 : i64, scratch_operands = 1 : i64, tpu.core_type = #tpu.core_type<tc>, window_params = [{transform_indices = @transform_0, window_bounds = array<i64: 24, 128>}, {transform_indices = @transform_1, window_bounds = array<i64: 8, 128>}, {pipeline_mode = #tpu.pipeline_mode<synchronous>, transform_indices = @transform_2, window_bounds = array<i64: 3, 128>}, {transform_indices = @transform_3, window_bounds = array<i64: 24, 128>}]} {
    %c24_i32 = arith.constant 24 : i32
    %0 = arith.muli %arg0, %c24_i32 : i32
    %c0_i32 = arith.constant 0 : i32
    %c16_i32 = arith.constant 16 : i32
    %1 = arith.muli %c0_i32, %c16_i32 : i32
    %2 = tpu.assume_multiple %1, 16 : i32
    %3 = arith.index_cast %2 : i32 to index
    %c0 = arith.constant 0 : index
    %4 = vector.load %arg1[%3, %c0] : memref<24x128xf32, #tpu.memory_space<vmem>>, vector<16x128xf32>
    %c0_0 = arith.constant 0 : index
    %c0_1 = arith.constant 0 : index
    %5 = vector.load %arg3[%c0_0, %c0_1] : memref<3x128xf32, #tpu.memory_space<vmem>>, vector<1x128xf32>
    %6 = vector.broadcast %5 : vector<1x128xf32> to vector<16x128xf32>
    %7 = arith.mulf %4, %6 : vector<16x128xf32>
    %c1_i32 = arith.constant 1 : i32
    %8 = arith.addi %2, %c1_i32 : i32
    %9 = arith.index_cast %8 : i32 to index
    %c0_2 = arith.constant 0 : index
    %10 = vector.load %arg1[%9, %c0_2] : memref<24x128xf32, #tpu.memory_space<vmem>>, vector<16x128xf32>
    %c1 = arith.constant 1 : index
    %c0_3 = arith.constant 0 : index
    %11 = vector.load %arg3[%c1, %c0_3] : memref<3x128xf32, #tpu.memory_space<vmem>>, vector<1x128xf32>
    %12 = vector.broadcast %11 : vector<1x128xf32> to vector<16x128xf32>
    %13 = arith.mulf %10, %12 : vector<16x128xf32>
    %14 = arith.addf %7, %13 : vector<16x128xf32>
    %c2_i32 = arith.constant 2 : i32
    %15 = arith.addi %2, %c2_i32 : i32
    %16 = arith.index_cast %15 : i32 to index
    %c0_4 = arith.constant 0 : index
    %17 = vector.load %arg1[%16, %c0_4] : memref<24x128xf32, #tpu.memory_space<vmem>>, vector<16x128xf32>
    %c2 = arith.constant 2 : index
    %c0_5 = arith.constant 0 : index
    %18 = vector.load %arg3[%c2, %c0_5] : memref<3x128xf32, #tpu.memory_space<vmem>>, vector<1x128xf32>
    %19 = vector.broadcast %18 : vector<1x128xf32> to vector<16x128xf32>
    %20 = arith.mulf %17, %19 : vector<16x128xf32>
    %21 = arith.addf %14, %20 : vector<16x128xf32>
    %22 = arith.index_cast %2 : i32 to index
    %c0_6 = arith.constant 0 : index
    %23 = vector.load %arg4[%22, %c0_6] : memref<24x128xf32, #tpu.memory_space<vmem>>, vector<16x128xf32>
    tpu.vector_store %arg4[%22, %c0_6], %21 {strides = array<i32>} : memref<24x128xf32, #tpu.memory_space<vmem>>, vector<16x128xf32>,
    %c1_i32_7 = arith.constant 1 : i32
    %c0_i32_8 = arith.constant 0 : i32
    %24 = arith.cmpi eq, %arg0, %c0_i32_8 : i32
    %25 = arith.extui %24 : i1 to i32
    %c0_i32_9 = arith.constant 0 : i32
    %26 = arith.cmpi ne, %25, %c0_i32_9 : i32
    scf.if %26 {
      %c14 = arith.constant 14 : index
      %c0_33 = arith.constant 0 : index
      %51 = vector.load %arg1[%c14, %c0_33] : memref<24x128xf32, #tpu.memory_space<vmem>>, vector<4x128xf32>
      %52 = tpu.iota {dimensions = array<i32: 0>} : vector<4x1xi32>
      %c14_i32 = arith.constant 14 : i32
      %53 = vector.broadcast %c14_i32 : i32 to vector<4x1xi32>
      %54 = arith.addi %52, %53 : vector<4x1xi32>
      %c16_i32_34 = arith.constant 16 : i32
      %55 = vector.broadcast %c16_i32_34 : i32 to vector<4x1xi32>
      %56 = arith.cmpi slt, %54, %55 : vector<4x1xi32>
      %cst = arith.constant 0.000000e+00 : f32
      %57 = vector.shape_cast %56 : vector<4x1xi1> to vector<4x1xi1>
      %58 = vector.broadcast %57 : vector<4x1xi1> to vector<4x128xi1>
      %59 = vector.broadcast %cst : f32 to vector<4x128xf32>
      %60 = arith.select %58, %51, %59 : vector<4x128xi1>, vector<4x128xf32>
      %61 = vector.extract_strided_slice %60 {offsets = [0, 0], sizes = [2, 128], strides = [1, 1]} : vector<4x128xf32> to vector<2x128xf32>
      %c0_35 = arith.constant 0 : index
      %c0_36 = arith.constant 0 : index
      %62 = vector.load %arg3[%c0_35, %c0_36] : memref<3x128xf32, #tpu.memory_space<vmem>>, vector<1x128xf32>
      %63 = vector.broadcast %62 : vector<1x128xf32> to vector<2x128xf32>
      %64 = arith.mulf %61, %63 : vector<2x128xf32>
      %65 = vector.extract_strided_slice %60 {offsets = [1, 0], sizes = [2, 128], strides = [1, 1]} : vector<4x128xf32> to vector<2x128xf32>
      %c1_37 = arith.constant 1 : index
      %c0_38 = arith.constant 0 : index
      %66 = vector.load %arg3[%c1_37, %c0_38] : memref<3x128xf32, #tpu.memory_space<vmem>>, vector<1x128xf32>
      %67 = vector.broadcast %66 : vector<1x128xf32> to vector<2x128xf32>
      %68 = arith.mulf %65, %67 : vector<2x128xf32>
      %69 = arith.addf %64, %68 : vector<2x128xf32>
      %70 = vector.extract_strided_slice %60 {offsets = [2, 0], sizes = [2, 128], strides = [1, 1]} : vector<4x128xf32> to vector<2x128xf32>
      %c2_39 = arith.constant 2 : index
      %c0_40 = arith.constant 0 : index
      %71 = vector.load %arg3[%c2_39, %c0_40] : memref<3x128xf32, #tpu.memory_space<vmem>>, vector<1x128xf32>
      %72 = vector.broadcast %71 : vector<1x128xf32> to vector<2x128xf32>
      %73 = arith.mulf %70, %72 : vector<2x128xf32>
      %74 = arith.addf %69, %73 : vector<2x128xf32>
      %c14_41 = arith.constant 14 : index
      %c0_42 = arith.constant 0 : index
      %75 = vector.load %arg4[%c14_41, %c0_42] : memref<24x128xf32, #tpu.memory_space<vmem>>, vector<2x128xf32>
      tpu.vector_store %arg4[%c14_41, %c0_42], %74 {strides = array<i32>} : memref<24x128xf32, #tpu.memory_space<vmem>>, vector<2x128xf32>,
    } else {
    }
    %c16 = arith.constant 16 : index
    %c0_10 = arith.constant 0 : index
    %27 = vector.load %arg1[%c16, %c0_10] : memref<24x128xf32, #tpu.memory_space<vmem>>, vector<8x128xf32>
    %c0_11 = arith.constant 0 : index
    %c0_12 = arith.constant 0 : index
    %28 = vector.load %arg5[%c0_11, %c0_12] : memref<16x128xf32, #tpu.memory_space<vmem>>, vector<8x128xf32>
    tpu.vector_store %arg5[%c0_11, %c0_12], %27 {strides = array<i32>} : memref<16x128xf32, #tpu.memory_space<vmem>>, vector<8x128xf32>,
    %c0_13 = arith.constant 0 : index
    %c0_14 = arith.constant 0 : index
    %29 = vector.load %arg2[%c0_13, %c0_14] : memref<8x128xf32, #tpu.memory_space<vmem>>, vector<8x128xf32>
    %c8 = arith.constant 8 : index
    %c0_15 = arith.constant 0 : index
    %30 = vector.load %arg5[%c8, %c0_15] : memref<16x128xf32, #tpu.memory_space<vmem>>, vector<8x128xf32>
    tpu.vector_store %arg5[%c8, %c0_15], %29 {strides = array<i32>} : memref<16x128xf32, #tpu.memory_space<vmem>>, vector<8x128xf32>,
    %c24_i32_16 = arith.constant 24 : i32
    %31 = arith.addi %0, %c24_i32_16 : i32
    %c8_i32 = arith.constant 8 : i32
    %32 = arith.addi %31, %c8_i32 : i32
    %c16_i32_17 = arith.constant 16 : i32
    %33 = arith.cmpi sgt, %32, %c16_i32_17 : i32
    %34 = arith.extui %33 : i1 to i32
    %c0_i32_18 = arith.constant 0 : i32
    %35 = arith.cmpi ne, %34, %c0_i32_18 : i32
    scf.if %35 {
      %51 = tpu.iota {dimensions = array<i32: 0>} : vector<16x1xi32>
      %c16_i32_33 = arith.constant 16 : i32
      %52 = arith.addi %0, %c16_i32_33 : i32
      %53 = vector.broadcast %52 : i32 to vector<16x1xi32>
      %54 = arith.addi %51, %53 : vector<16x1xi32>
      %c0_34 = arith.constant 0 : index
      %c0_35 = arith.constant 0 : index
      %55 = vector.load %arg5[%c0_34, %c0_35] : memref<16x128xf32, #tpu.memory_space<vmem>>, vector<16x128xf32>
      %c16_i32_36 = arith.constant 16 : i32
      %56 = vector.broadcast %c16_i32_36 : i32 to vector<16x1xi32>
      %57 = arith.cmpi slt, %54, %56 : vector<16x1xi32>
      %cst = arith.constant 0.000000e+00 : f32
      %58 = vector.broadcast %cst : f32 to vector<16x128xf32>
      %59 = vector.shape_cast %57 : vector<16x1xi1> to vector<16x1xi1>
      %60 = vector.broadcast %59 : vector<16x1xi1> to vector<16x128xi1>
      %61 = arith.select %60, %55, %58 : vector<16x128xi1>, vector<16x128xf32>
      %c0_37 = arith.constant 0 : index
      %c0_38 = arith.constant 0 : index
      %62 = vector.load %arg5[%c0_37, %c0_38] : memref<16x128xf32, #tpu.memory_space<vmem>>, vector<16x128xf32>
      tpu.vector_store %arg5[%c0_37, %c0_38], %61 {strides = array<i32>} : memref<16x128xf32, #tpu.memory_space<vmem>>, vector<16x128xf32>,
    } else {
    }
    %c0_19 = arith.constant 0 : index
    %c0_20 = arith.constant 0 : index
    %36 = vector.load %arg5[%c0_19, %c0_20] : memref<16x128xf32, #tpu.memory_space<vmem>>, vector<8x128xf32>
    %c0_21 = arith.constant 0 : index
    %c0_22 = arith.constant 0 : index
    %37 = vector.load %arg3[%c0_21, %c0_22] : memref<3x128xf32, #tpu.memory_space<vmem>>, vector<1x128xf32>
    %38 = vector.broadcast %37 : vector<1x128xf32> to vector<8x128xf32>
    %39 = arith.mulf %36, %38 : vector<8x128xf32>
    %c1_23 = arith.constant 1 : index
    %c0_24 = arith.constant 0 : index
    %40 = vector.load %arg5[%c1_23, %c0_24] : memref<16x128xf32, #tpu.memory_space<vmem>>, vector<8x128xf32>
    %c1_25 = arith.constant 1 : index
    %c0_26 = arith.constant 0 : index
    %41 = vector.load %arg3[%c1_25, %c0_26] : memref<3x128xf32, #tpu.memory_space<vmem>>, vector<1x128xf32>
    %42 = vector.broadcast %41 : vector<1x128xf32> to vector<8x128xf32>
    %43 = arith.mulf %40, %42 : vector<8x128xf32>
    %44 = arith.addf %39, %43 : vector<8x128xf32>
    %c2_27 = arith.constant 2 : index
    %c0_28 = arith.constant 0 : index
    %45 = vector.load %arg5[%c2_27, %c0_28] : memref<16x128xf32, #tpu.memory_space<vmem>>, vector<8x128xf32>
    %c2_29 = arith.constant 2 : index
    %c0_30 = arith.constant 0 : index
    %46 = vector.load %arg3[%c2_29, %c0_30] : memref<3x128xf32, #tpu.memory_space<vmem>>, vector<1x128xf32>
    %47 = vector.broadcast %46 : vector<1x128xf32> to vector<8x128xf32>
    %48 = arith.mulf %45, %47 : vector<8x128xf32>
    %49 = arith.addf %44, %48 : vector<8x128xf32>
    %c16_31 = arith.constant 16 : index
    %c0_32 = arith.constant 0 : index
    %50 = vector.load %arg4[%c16_31, %c0_32] : memref<24x128xf32, #tpu.memory_space<vmem>>, vector<8x128xf32>
    tpu.vector_store %arg4[%c16_31, %c0_32], %49 {strides = array<i32>} : memref<24x128xf32, #tpu.memory_space<vmem>>, vector<8x128xf32>,
    return
  }
  func.func @transform_0(%arg0: i32) -> (i32, i32) {
    %c0_i32 = arith.constant 0 : i32
    %c0_i32_0 = arith.constant 0 : i32
    return %arg0, %c0_i32 : i32, i32
  }
  func.func @transform_1(%arg0: i32) -> (i32, i32) {
    %c1_i32 = arith.constant 1 : i32
    %0 = arith.addi %arg0, %c1_i32 : i32
    %c3_i32 = arith.constant 3 : i32
    %1 = arith.muli %0, %c3_i32 : i32
    %c1_i32_0 = arith.constant 1 : i32
    %2 = arith.minsi %1, %c1_i32_0 : i32
    %c0_i32 = arith.constant 0 : i32
    %c0_i32_1 = arith.constant 0 : i32
    return %2, %c0_i32 : i32, i32
  }
  func.func @transform_2(%arg0: i32) -> (i32, i32) {
    %c0_i32 = arith.constant 0 : i32
    %c0_i32_0 = arith.constant 0 : i32
    %c0_i32_1 = arith.constant 0 : i32
    return %c0_i32, %c0_i32_0 : i32, i32
  }
  func.func @transform_3(%arg0: i32) -> (i32, i32) {
    %c0_i32 = arith.constant 0 : i32
    %c0_i32_0 = arith.constant 0 : i32
    return %arg0, %c0_i32 : i32, i32
  }
}

</mosaic_0001>

<llo_original>
// kernel: tpu_custom_call.1
$region0: #{tpu_custom_call.1}
  #allocation0 [shape = 'u32[]', space=smem, size = 0x4, offset = 0x4, fixed_abs, tag = 'smem constant byte address 0x4 - core index']
  #allocation1 [shape = 'u32[72,128]{1,0:T(1,128)}', space=vmem, size = 0x9000, scoped, tag = 'internal scratch']
  #allocation2 [shape = 'f32[16,128]{1,0:T(8,128)}', space=vmem, size = 0x2000, scoped, tag = 'scratch operand']
  %s0 = inlined_call_operand.hbm [shape: f32[16,128], index: 0, kind: input, shape index: {}]
  %s1 = inlined_call_operand.hbm [shape: f32[16,128], index: 1, kind: input, shape index: {}]
  %s2 = inlined_call_operand.hbm [shape: f32[3,128], index: 2, kind: input, shape index: {}]
  %s3 = inlined_call_operand.hbm [shape: f32[16,128], index: 3, kind: output, shape index: {}]
  %s4 = sld [smem:[#allocation0]]
  $region42: #{tpu_custom_call.1} parent=0
    _
  %s6 = ssub.s32 1, %s4
  %s7 = scalar_select 0, %s6, %s4
  $region1: #{tpu_custom_call.1} parent=0
    #allocation3 [shape = 'u8[12288]{0}', space=vmem, size = 0x3000, scoped, tag = 'input window, operand 0, single buffered']
    #allocation4 [shape = 's32[1]{0}', space=sflag, size = 0x4, scoped, tag = 'scoped memory for tpu_custom_call.1']
    #allocation5 [shape = 's32[1]{0}', space=sflag, size = 0x4, scoped, tag = 'scoped memory for tpu_custom_call.1']
    #allocation6 [shape = 'u8[4096]{0}', space=vmem, size = 0x1000, scoped, tag = 'input window, operand 1, single buffered']
    #allocation7 [shape = 's32[1]{0}', space=sflag, size = 0x4, scoped, tag = 'scoped memory for tpu_custom_call.1']
    #allocation8 [shape = 'u8[2048]{0}', space=vmem, size = 0x800, scoped, tag = 'input window, operand 2, single buffered']
    #allocation9 [shape = 'u8[12288]{0}', space=vmem, size = 0x3000, scoped, tag = 'output window, operand 0, single buffered']
    %8 = vsyncpa [#allocation4], 0
    %9 = vsyncpa [#allocation7], 0
    %10 = vsyncpa [#allocation5], 0
    // Predicated region
    $region2: #{tpu_custom_call.1} parent=1 // pred_check
      _
    $region3: #{tpu_custom_call.1} parent=1 // pred_check_branch
      %12 = sbr.rel (0) target = $region5
    $region4: #{tpu_custom_call.1} parent=1 // pred_region
      %14 = vsyncadd [#allocation4], 128
      %s15 = sshll.u32 %s0, 4
      %s16 = int_to_ptr.hbm [resolvable:$true] %s15
      %s17 = sshll.u32 [#allocation3], 4
      %s18 = int_to_ptr.vmem [resolvable:$true] %s17
      %23 = dma.hbm_to_vmem [thread:$0]  %s16, 256, %s18, [#allocation4], 128, 128, 8
    $region5: #{tpu_custom_call.1} parent=1 // pred_fallthru
      _
    // Predicated region
    $region6: #{tpu_custom_call.1} parent=1 // pred_check
      _
    $region7: #{tpu_custom_call.1} parent=1 // pred_check_branch
      %25 = sbr.rel (0) target = $region9
    $region8: #{tpu_custom_call.1} parent=1 // pred_region
      %s26 = sadd.s32 0, 1
      %s27 = smul.u32 %s26, 3
      %p28 = scmp.lt.s32.totalorder %s27, 1
      %s29 = scalar_select %p28, %s27, 1
      %31 = vsyncadd [#allocation7], 0
      %s32 = smul.addr %s29, 8
      %s33 = scalar_lea.hbm %s1, %s32
      %s35 = sshll.u32 %s33, 4
      %s36 = int_to_ptr.hbm [resolvable:$true] %s35
      %s37 = sshll.u32 [#allocation6], 4
      %s38 = int_to_ptr.vmem [resolvable:$true] %s37
      %40 = dma.hbm_to_vmem [thread:$0]  %s36, 128, %s38, [#allocation7]
    $region9: #{tpu_custom_call.1} parent=1 // pred_fallthru
      _
    // Predicated region
    $region10: #{tpu_custom_call.1} parent=1 // pred_check
      _
    $region11: #{tpu_custom_call.1} parent=1 // pred_check_branch
      %42 = sbr.rel (0) target = $region13
    $region12: #{tpu_custom_call.1} parent=1 // pred_region
      %44 = vsyncadd [#allocation7], 0
      %s46 = sshll.u32 %s2, 4
      %s47 = int_to_ptr.hbm [resolvable:$true] %s46
      %s48 = sshll.u32 [#allocation8], 4
      %s49 = int_to_ptr.vmem [resolvable:$true] %s48
      %51 = dma.hbm_to_vmem [thread:$0]  %s47, 64, %s49, [#allocation7]
    $region13: #{tpu_custom_call.1} parent=1 // pred_fallthru
      _
    // Predicated region
    $region14: #{tpu_custom_call.1} parent=1 // pred_check
      _
    $region15: #{tpu_custom_call.1} parent=1 // pred_check_branch
      %53 = sbr.rel (0) target = $region17
    $region16: #{tpu_custom_call.1} parent=1 // pred_region
      %55 = dma.done [#allocation4], 384
    $region17: #{tpu_custom_call.1} parent=1 // pred_fallthru
      _
    // Predicated region
    $region18: #{tpu_custom_call.1} parent=1 // pred_check
      _
    $region19: #{tpu_custom_call.1} parent=1 // pred_check_branch
      %57 = sbr.rel (0) target = $region21
    $region20: #{tpu_custom_call.1} parent=1 // pred_region
      %59 = dma.done [#allocation7], 128
    $region21: #{tpu_custom_call.1} parent=1 // pred_fallthru
      _
    // Predicated region
    $region22: #{tpu_custom_call.1} parent=1 // pred_check
      _
    $region23: #{tpu_custom_call.1} parent=1 // pred_check_branch
      %61 = sbr.rel (0) target = $region25
    $region24: #{tpu_custom_call.1} parent=1 // pred_region
      %63 = dma.done [#allocation7], 64
    $region25: #{tpu_custom_call.1} parent=1 // pred_fallthru
      _
    %s64 = sadd.s32 0, 1
    %s65 = smul.u32 %s64, 3
    %p66 = scmp.lt.s32.totalorder %s65, 1
    %s67 = scalar_select %p66, %s65, 1
    %s68 = smul.u32 0, 24
    %v69 = vld [vmem:[#allocation3] sm:$0xff]
    %v70 = vld [vmem:[#allocation3 + $0x8] sm:$0xff]
    %v71 = vld [vmem:[#allocation8] sm:$0x1]
    %v72 = vperm.slane %v71, 0
    %v73 = vmul.f32 %v69, %v72
    %v74 = vmul.f32 %v70, %v72
    %s75 = sadd.s32 0, 1
    %s76 = scalar_lea.vmem [#allocation3], %s75
    %v77 = vld [vmem:[%s76] sm:$0xff]
    %v78 = vld [vmem:[%s76 + $0x8] sm:$0xff]
    %v79 = vld [vmem:[#allocation8 + $0x1] sm:$0x1]
    %v80 = vperm.slane %v79, 0
    %v81 = vmul.f32 %v77, %v80
    %v82 = vmul.f32 %v78, %v80
    %v83 = vadd.f32 %v73, %v81
    %v84 = vadd.f32 %v74, %v82
    %s85 = sadd.s32 0, 2
    %s86 = scalar_lea.vmem [#allocation3], %s85
    %v87 = vld [vmem:[%s86] sm:$0xff]
    %v88 = vld [vmem:[%s86 + $0x8] sm:$0xff]
    %v89 = vld [vmem:[#allocation8 + $0x2] sm:$0x1]
    %v90 = vperm.slane %v89, 0
    %v91 = vmul.f32 %v87, %v90
    %v92 = vmul.f32 %v88, %v90
    %v93 = vadd.f32 %v83, %v91
    %v94 = vadd.f32 %v84, %v92
    %95 = vst [vmem:[#allocation9] sm:$0xff] %v93
    %96 = vst [vmem:[#allocation9 + $0x8] sm:$0xff] %v94
    %p97 = scmp.eq.s32.totalorder 0, 0
    // Predicated region
    $region26: #{tpu_custom_call.1} parent=1 // pred_check
      %p98 = pneg %p97
    $region27: #{tpu_custom_call.1} parent=1 // pred_check_branch
      %100 = sbr.rel (%p98) target = $region29
    $region28: #{tpu_custom_call.1} parent=1 // pred_region
      %v101 = vld [vmem:[#allocation3 + $0xe] sm:$0xf]
      %v102 = vlaneseq
      %v103 = vshrl.u32 %v102, 7
      %v104 = vadd.s32 %v103, 14
      %vm105 = vcmp.lt.s32.totalorder %v104, 16
      %v106 = vsel %vm105, 1, 0
      %vm107 = vcmp.eq.s32.totalorder %v106, 1
      %v108 = vsel %vm107, %v101, 0.0
      %v109 = vld [vmem:[#allocation8] sm:$0x1]
      %v110 = vperm.slane %v109, 0
      %v111 = vmul.f32 %v108, %v110
      %v112 = vld [vmem:[#allocation8 + $0x1] sm:$0x1]
      %v113 = vperm.slane %v112, 0
      %v114 = vmul.f32 %v108, %v113
      %v116 = vrot.slane %v114, 1
      %v118 = vadd.f32 %v111, %v116
      %v119 = vld [vmem:[#allocation8 + $0x2] sm:$0x1]
      %v120 = vperm.slane %v119, 0
      %v121 = vmul.f32 %v108, %v120
      %v123 = vrot.slane %v121, 2
      %v125 = vadd.f32 %v118, %v123
      %126 = vst [vmem:[#allocation9 + $0xe] sm:$0x3] %v125
    $region29: #{tpu_custom_call.1} parent=1 // pred_fallthru
      _
    %v127 = vld [vmem:[#allocation3 + $0x10] sm:$0xff]
    %128 = vst [vmem:[#allocation2] sm:$0xff] %v127
    %v129 = vld [vmem:[#allocation6] sm:$0xff]
    %130 = vst [vmem:[#allocation2 + $0x8] sm:$0xff] %v129
    %s131 = sadd.s32 %s68, 32
    %p132 = scmp.gt.s32.totalorder %s131, 16
    // Predicated region
    $region30: #{tpu_custom_call.1} parent=1 // pred_check
      %p133 = pneg %p132
    $region31: #{tpu_custom_call.1} parent=1 // pred_check_branch
      %135 = sbr.rel (%p133) target = $region33
    $region32: #{tpu_custom_call.1} parent=1 // pred_region
      %v136 = vlaneseq
      %v137 = vshrl.u32 %v136, 7
      %v138 = vadd.s32 %v137, 8
      %s139 = sadd.s32 %s68, 16
      %v140 = vstv %s139
      %v141 = vadd.s32 %v137, %v140
      %v142 = vadd.s32 %v138, %v140
      %v143 = vld [vmem:[#allocation2] sm:$0xff]
      %v144 = vld [vmem:[#allocation2 + $0x8] sm:$0xff]
      %vm145 = vcmp.lt.s32.totalorder %v141, 16
      %vm146 = vcmp.lt.s32.totalorder %v142, 16
      %v147 = vsel %vm145, 1, 0
      %v148 = vsel %vm146, 1, 0
      %vm149 = vcmp.eq.s32.totalorder %v147, 1
      %vm150 = vcmp.eq.s32.totalorder %v148, 1
      %v151 = vsel %vm149, %v143, 0.0
      %v152 = vsel %vm150, %v144, 0.0
      %153 = vst [vmem:[#allocation2] sm:$0xff] %v151
      %154 = vst [vmem:[#allocation2 + $0x8] sm:$0xff] %v152
    $region33: #{tpu_custom_call.1} parent=1 // pred_fallthru
      _
    %v155 = vld [vmem:[#allocation2] sm:$0xff]
    %v156 = vld [vmem:[#allocation8] sm:$0x1]
    %v157 = vperm.slane %v156, 0
    %v158 = vmul.f32 %v155, %v157
    %v159 = vld [vmem:[#allocation2 + $0x1] sm:$0xff]
    %v160 = vld [vmem:[#allocation8 + $0x1] sm:$0x1]
    %v161 = vperm.slane %v160, 0
    %v162 = vmul.f32 %v159, %v161
    %v163 = vadd.f32 %v158, %v162
    %v164 = vld [vmem:[#allocation2 + $0x2] sm:$0xff]
    %v165 = vld [vmem:[#allocation8 + $0x2] sm:$0x1]
    %v166 = vperm.slane %v165, 0
    %v167 = vmul.f32 %v164, %v166
    %v168 = vadd.f32 %v163, %v167
    %169 = vst [vmem:[#allocation9 + $0x10] sm:$0xff] %v168
    // Predicated region
    $region34: #{tpu_custom_call.1} parent=1 // pred_check
      _
    $region35: #{tpu_custom_call.1} parent=1 // pred_check_branch
      %171 = sbr.rel (0) target = $region37
    $region36: #{tpu_custom_call.1} parent=1 // pred_region
      %173 = vsyncadd [#allocation5], 128
      %s174 = sshll.u32 [#allocation9], 4
      %s175 = int_to_ptr.vmem [resolvable:$true] %s174
      %s176 = sshll.u32 %s3, 4
      %s177 = int_to_ptr.hbm [resolvable:$true] %s176
      %182 = dma.vmem_to_hbm [thread:$0]  %s175, 256, %s177, [#allocation5], 128, 128, 8
    $region37: #{tpu_custom_call.1} parent=1 // pred_fallthru
      _
    // Predicated region
    $region38: #{tpu_custom_call.1} parent=1 // pred_check
      _
    $region39: #{tpu_custom_call.1} parent=1 // pred_check_branch
      %184 = sbr.rel (0) target = $region41
    $region40: #{tpu_custom_call.1} parent=1 // pred_region
      %186 = dma.done [#allocation5], 384
    $region41: #{tpu_custom_call.1} parent=1 // pred_fallthru
      _
    %187 = vsyncpa [#allocation4], 1
    %188 = vsyncpa [#allocation7], 1
    %189 = vsyncpa [#allocation5], 1

</llo_original>
